<compile_context>
chip_gen: v5e
topology: v5e:2x2
jax: 0.10.0
libtpu: 0.0.40
codegen_flags: <defaults>
</compile_context>

<pallas_src>
import functools

import jax
import jax.numpy as jnp
from jax.experimental import pallas as pl
from jax.experimental.pallas import tpu as pltpu

NUM_CLASSES = 2
SMOOTHING = 0.1
LANES = 128
MIN_TILE_ROWS = 32   # sublane granularity safe for f32 / bf16 / int8 blocks
CHUNK_ROWS = 32      # sub-chunk processed per accumulator step (4 vregs per temp)


def _round_up(x, m):
    return ((x + m - 1) // m) * m


def _wsl_smoothing_kernel(d_ref, tgt_ref, ns_ref, out_ref, *,
                          batch_size, smoothing, chunk):
    """One batch tile: (tr,128) d / targets / ns  ->  (1, chunk, 128) partial sums."""
    pid = pl.program_id(0)
    last = pl.num_programs(0) - 1
    tr = d_ref.shape[0]
    n_chunks = tr // chunk

    # Per-branch label constants (folded: l0 + l1 is constant per branch).
    s = float(smoothing)
    base = s / (NUM_CLASSES - 1)
    one_m_s = 1.0 - s
    l_sum_neg = one_m_s + 2.0 * base       # l0 + l1, target == 0
    l_sum_pos = one_m_s + 2.0 * s * base   # l0 + l1, target == 1
    l1_pos = one_m_s + s * base            # l1,      target == 1
    c_neg = one_m_s + base                 # l1_neg = c_neg - (1-s) * ns

    def run(masked):
        if masked:
            r_iota = jax.lax.broadcasted_iota(jnp.int32, (chunk, LANES), 0)
            l_iota = jax.lax.broadcasted_iota(jnp.int32, (chunk, LANES), 1)
            chunk_iota = r_iota * LANES + l_iota
            tile_base = pid * (tr * LANES)

        def body(c, acc):
            r0 = pl.multiple_of(c * chunk, chunk)
            dd = d_ref[pl.ds(r0, chunk), :].astype(jnp.float32)
            ns = ns_ref[pl.ds(r0, chunk), :].astype(jnp.float32)
            tg = tgt_ref[pl.ds(r0, chunk), :]

            is_neg = tg == 0
            l_sum = jnp.where(is_neg, l_sum_neg, l_sum_pos)
            l1 = jnp.where(is_neg, c_neg - one_m_s * ns, l1_pos)

            # Stable softplus(d) = max(d,0) + log1p(exp(-|d|));
            # per-element loss = (l0+l1)*softplus(d) - l1*d.
            sp = jnp.maximum(dd, 0.0) + jnp.log1p(jnp.exp(-jnp.abs(dd)))
            per = l_sum * sp - l1 * dd

            if masked:
                gidx = (tile_base + r0 * LANES) + chunk_iota
                per = jnp.where(gidx < batch_size, per, 0.0)
            return acc + per

        init = jnp.zeros((chunk, LANES), jnp.float32)
        if n_chunks % 2 == 0 and n_chunks >= 2:
            # Manual 2x unroll for extra ILP (hides EUP latency).
            def body2(c, acc):
                return body(2 * c + 1, body(2 * c, acc))
            acc = jax.lax.fori_loop(0, n_chunks // 2, body2, init)
        else:
            acc = jax.lax.fori_loop(0, n_chunks, body, init)
        out_ref[...] = acc[None]

    @pl.when(pid != last)
    def _fast():                # no padding / ragged rows possible here
        run(False)

    @pl.when(pid == last)
    def _tail():                # padding + ragged block rows live only in last tile
        run(True)


def wsl_smoothing_loss(outputs, targets, ns_scores, smoothing=SMOOTHING,
                       tile_rows=1024):
    """outputs: (B, 2), targets: (B,) int, ns_scores: (B,) float -> scalar f32."""
    B, C = outputs.shape
    assert C == NUM_CLASSES

    # Single fused pass over the logits: the 2-class loss only needs d = x1 - x0.
    out_f = outputs.astype(jnp.float32)
    d = out_f[:, 1] - out_f[:, 0]

    rows = pl.cdiv(B, LANES)
    if B % LANES == 0 and rows >= MIN_TILE_ROWS:
        rows_arr, pad = rows, 0                       # free reshape, no copy
    else:
        rows_arr = max(MIN_TILE_ROWS, _round_up(rows, MIN_TILE_ROWS))
        pad = rows_arr * LANES - B                    # tiny-B / ragged-B fallback

    def lanes(v):
        if pad:
            v = jnp.pad(v, (0, pad))
        return v.reshape(rows_arr, LANES)

    d2 = lanes(d)                   # f32
    tgt2 = lanes(targets)           # native int dtype, compared to 0 in-kernel
    ns2 = lanes(ns_scores)          # native float dtype, upcast in-kernel

    tr = max(MIN_TILE_ROWS,
             (min(int(tile_rows), rows_arr) // MIN_TILE_ROWS) * MIN_TILE_ROWS)
    num_tiles = pl.cdiv(rows_arr, tr)
    if num_tiles == 1 and rows_arr >= 2 * MIN_TILE_ROWS:
        # v7x megacore: give both TensorCores a tile.
        tr = _round_up((rows_arr + 1) // 2, MIN_TILE_ROWS)
        num_tiles = pl.cdiv(rows_arr, tr)

    kernel = functools.partial(_wsl_smoothing_kernel, batch_size=B,
                               smoothing=float(smoothing), chunk=CHUNK_ROWS)
    tile_spec = pl.BlockSpec((tr, LANES), lambda i: (i, 0))

    elems = num_tiles * tr * LANES
    in_bytes = (d2.dtype.itemsize + tgt2.dtype.itemsize + ns2.dtype.itemsize)

    partials = pl.pallas_call(
        kernel,
        out_shape=jax.ShapeDtypeStruct((num_tiles, CHUNK_ROWS, LANES), jnp.float32),
        grid=(num_tiles,),
        in_specs=[tile_spec, tile_spec, tile_spec],
        out_specs=pl.BlockSpec((1, CHUNK_ROWS, LANES), lambda i: (i, 0, 0)),
        compiler_params=pltpu.CompilerParams(
            dimension_semantics=("parallel",)),
        cost_estimate=pl.CostEstimate(
            flops=16 * elems,
            transcendentals=2 * elems,
            bytes_accessed=elems * in_bytes + num_tiles * CHUNK_ROWS * LANES * 4),
    )(d2, tgt2, ns2)

    # Tiny final reduction + mean in plain JAX (keeps the grid axis parallel).
    return jnp.sum(partials) / jnp.float32(B)


def _reference_loss(outputs, targets, ns_scores, s=SMOOTHING, C=NUM_CLASSES):
    base = s / (C - 1)
    one_hot = jax.nn.one_hot(targets, C, dtype=jnp.float32)
    smoothed = (1.0 - s) * one_hot + s * base
    adj = jnp.stack(
        [(1.0 - s) * ns_scores + base, (1.0 - s) * (1.0 - ns_scores) + base],
        axis=1)
    labels = jnp.where((targets == 0)[:, None], adj, smoothed)
    log_probs = jax.nn.log_softmax(outputs.astype(jnp.float32), axis=1)
    return jnp.mean(jnp.sum(-labels * log_probs, axis=1))


if __name__ == "__main__":
    loss_fn = jax.jit(wsl_smoothing_loss, static_argnames=("smoothing", "tile_rows"))

    # Small primary check (padded tiny batch, single tile).
    k1, k2, k3 = jax.random.split(jax.random.PRNGKey(0), 3)
    B = 8
    outputs = jax.random.normal(k1, (B, NUM_CLASSES), dtype=jnp.float32)
    targets = jax.random.randint(k2, (B,), 0, NUM_CLASSES, dtype=jnp.int32)
    ns_scores = jax.random.uniform(k3, (B,), dtype=jnp.float32)
    loss = loss_fn(outputs, targets, ns_scores)
    jax.block_until_ready(loss)
    ref = _reference_loss(outputs, targets, ns_scores)
    assert jnp.allclose(loss, ref, atol=1e-5, rtol=1e-5), (loss, ref)

    # Multi-tile, zero-copy fast path (B % 128 == 0) with a ragged, masked last tile.
    k4, k5, k6 = jax.random.split(jax.random.PRNGKey(1), 3)
    B2 = 128 * 70
    outputs2 = jax.random.normal(k4, (B2, NUM_CLASSES), dtype=jnp.float32)
    targets2 = jax.random.randint(k5, (B2,), 0, NUM_CLASSES, dtype=jnp.int32)
    ns2 = jax.random.uniform(k6, (B2,), dtype=jnp.float32)
    loss2 = loss_fn(outputs2, targets2, ns2, tile_rows=32)
    jax.block_until_ready(loss2)
    ref2 = _reference_loss(outputs2, targets2, ns2)
    assert jnp.allclose(loss2, ref2, atol=1e-5, rtol=1e-4), (loss2, ref2)

    # Ragged batch (B % 128 != 0): padded fallback path + mask.
    k7, k8, k9 = jax.random.split(jax.random.PRNGKey(2), 3)
    B3 = 3000
    outputs3 = jax.random.normal(k7, (B3, NUM_CLASSES), dtype=jnp.float32)
    targets3 = jax.random.randint(k8, (B3,), 0, NUM_CLASSES, dtype=jnp.int32)
    ns3 = jax.random.uniform(k9, (B3,), dtype=jnp.float32)
    loss3 = loss_fn(outputs3, targets3, ns3)
    jax.block_until_ready(loss3)
    ref3 = _reference_loss(outputs3, targets3, ns3)
    assert jnp.allclose(loss3, ref3, atol=1e-5, rtol=1e-4), (loss3, ref3)

    print("KERNEL_OK")
</pallas_src>

<mosaic_0001>
module attributes {stable_mosaic.version = 11 : i64} {
  func.func @_wsl_smoothing_kernel(%arg0: i32, %arg1: memref<32x128xf32, #tpu.memory_space<vmem>>, %arg2: memref<32x128xi32, #tpu.memory_space<vmem>>, %arg3: memref<32x128xf32, #tpu.memory_space<vmem>>, %arg4: memref<1x32x128xf32, #tpu.memory_space<vmem>>) attributes {dimension_semantics = [#tpu.dimension_semantics<parallel>], iteration_bounds = array<i64: 1>, scalar_prefetch = 0 : i64, scratch_operands = 0 : i64, tpu.core_type = #tpu.core_type<tc>, window_params = [{transform_indices = @transform_0, window_bounds = array<i64: 32, 128>}, {transform_indices = @transform_1, window_bounds = array<i64: 32, 128>}, {transform_indices = @transform_2, window_bounds = array<i64: 32, 128>}, {transform_indices = @transform_3, window_bounds = array<i64: 1, 32, 128>}]} {
    %c0_i32 = arith.constant 0 : i32
    %0 = arith.cmpi ne, %arg0, %c0_i32 : i32
    %1 = arith.extui %0 : i1 to i32
    %c0_i32_0 = arith.constant 0 : i32
    %2 = arith.cmpi ne, %1, %c0_i32_0 : i32
    scf.if %2 {
      %cst = arith.constant 0.000000e+00 : f32
      %6 = vector.broadcast %cst : f32 to vector<32x128xf32>
      %c0_i32_3 = arith.constant 0 : i32
      %c32_i32 = arith.constant 32 : i32
      %7 = arith.muli %c0_i32_3, %c32_i32 : i32
      %8 = tpu.assume_multiple %7, 32 : i32
      %9 = arith.index_cast %8 : i32 to index
      %c0 = arith.constant 0 : index
      %10 = vector.load %arg1[%9, %c0] : memref<32x128xf32, #tpu.memory_space<vmem>>, vector<32x128xf32>
      %11 = arith.index_cast %8 : i32 to index
      %c0_4 = arith.constant 0 : index
      %12 = vector.load %arg3[%11, %c0_4] : memref<32x128xf32, #tpu.memory_space<vmem>>, vector<32x128xf32>
      %13 = arith.index_cast %8 : i32 to index
      %c0_5 = arith.constant 0 : index
      %14 = vector.load %arg2[%13, %c0_5] : memref<32x128xi32, #tpu.memory_space<vmem>>, vector<32x128xi32>
      %c0_i32_6 = arith.constant 0 : i32
      %15 = vector.broadcast %c0_i32_6 : i32 to vector<32x128xi32>
      %16 = arith.cmpi eq, %14, %15 : vector<32x128xi32>
      %cst_7 = arith.constant 1.100000e+00 : f32
      %cst_8 = arith.constant 9.200000e-01 : f32
      %17 = vector.broadcast %cst_7 : f32 to vector<32x128xf32>
      %18 = vector.broadcast %cst_8 : f32 to vector<32x128xf32>
      %19 = arith.select %16, %17, %18 : vector<32x128xi1>, vector<32x128xf32>
      %cst_9 = arith.constant 0.899999976 : f32
      %20 = vector.broadcast %cst_9 : f32 to vector<32x128xf32>
      %21 = arith.mulf %20, %12 : vector<32x128xf32>
      %cst_10 = arith.constant 1.000000e+00 : f32
      %22 = vector.broadcast %cst_10 : f32 to vector<32x128xf32>
      %23 = arith.subf %22, %21 : vector<32x128xf32>
      %cst_11 = arith.constant 9.100000e-01 : f32
      %24 = vector.broadcast %cst_11 : f32 to vector<32x128xf32>
      %25 = arith.select %16, %23, %24 : vector<32x128xi1>, vector<32x128xf32>
      %cst_12 = arith.constant 0.000000e+00 : f32
      %26 = vector.broadcast %cst_12 : f32 to vector<32x128xf32>
      %27 = arith.maximumf %10, %26 : vector<32x128xf32>
      %28 = math.absf %10 : vector<32x128xf32>
      %cst_13 = arith.constant 0.000000e+00 : f32
      %29 = vector.broadcast %cst_13 : f32 to vector<32x128xf32>
      %30 = arith.subf %29, %28 : vector<32x128xf32>
      %31 = math.exp %30 : vector<32x128xf32>
      %32 = math.log1p %31 : vector<32x128xf32>
      %33 = arith.addf %27, %32 : vector<32x128xf32>
      %34 = arith.mulf %19, %33 : vector<32x128xf32>
      %35 = arith.mulf %25, %10 : vector<32x128xf32>
      %36 = arith.subf %34, %35 : vector<32x128xf32>
      %37 = arith.addf %6, %36 : vector<32x128xf32>
      %c1_i32 = arith.constant 1 : i32
      %38 = vector.shape_cast %37 : vector<32x128xf32> to vector<1x32x128xf32>
      %c0_14 = arith.constant 0 : index
      %c0_15 = arith.constant 0 : index
      %c0_16 = arith.constant 0 : index
      %39 = vector.load %arg4[%c0_14, %c0_15, %c0_16] : memref<1x32x128xf32, #tpu.memory_space<vmem>>, vector<1x32x128xf32>
      tpu.vector_store %arg4[%c0_14, %c0_15, %c0_16], %38 {strides = array<i32>} : memref<1x32x128xf32, #tpu.memory_space<vmem>>, vector<1x32x128xf32>,
    } else {
    }
    %c0_i32_1 = arith.constant 0 : i32
    %3 = arith.cmpi eq, %arg0, %c0_i32_1 : i32
    %4 = arith.extui %3 : i1 to i32
    %c0_i32_2 = arith.constant 0 : i32
    %5 = arith.cmpi ne, %4, %c0_i32_2 : i32
    scf.if %5 {
      %6 = tpu.iota {dimensions = array<i32: 0>} : vector<32x128xi32>
      %7 = tpu.iota {dimensions = array<i32: 1>} : vector<32x128xi32>
      %c128_i32 = arith.constant 128 : i32
      %8 = vector.broadcast %c128_i32 : i32 to vector<32x128xi32>
      %9 = arith.muli %6, %8 : vector<32x128xi32>
      %10 = arith.addi %9, %7 : vector<32x128xi32>
      %c4096_i32 = arith.constant 4096 : i32
      %11 = arith.muli %arg0, %c4096_i32 : i32
      %cst = arith.constant 0.000000e+00 : f32
      %12 = vector.broadcast %cst : f32 to vector<32x128xf32>
      %c0_i32_3 = arith.constant 0 : i32
      %c32_i32 = arith.constant 32 : i32
      %13 = arith.muli %c0_i32_3, %c32_i32 : i32
      %14 = tpu.assume_multiple %13, 32 : i32
      %15 = arith.index_cast %14 : i32 to index
      %c0 = arith.constant 0 : index
      %16 = vector.load %arg1[%15, %c0] : memref<32x128xf32, #tpu.memory_space<vmem>>, vector<32x128xf32>
      %17 = arith.index_cast %14 : i32 to index
      %c0_4 = arith.constant 0 : index
      %18 = vector.load %arg3[%17, %c0_4] : memref<32x128xf32, #tpu.memory_space<vmem>>, vector<32x128xf32>
      %19 = arith.index_cast %14 : i32 to index
      %c0_5 = arith.constant 0 : index
      %20 = vector.load %arg2[%19, %c0_5] : memref<32x128xi32, #tpu.memory_space<vmem>>, vector<32x128xi32>
      %c0_i32_6 = arith.constant 0 : i32
      %21 = vector.broadcast %c0_i32_6 : i32 to vector<32x128xi32>
      %22 = arith.cmpi eq, %20, %21 : vector<32x128xi32>
      %cst_7 = arith.constant 1.100000e+00 : f32
      %cst_8 = arith.constant 9.200000e-01 : f32
      %23 = vector.broadcast %cst_7 : f32 to vector<32x128xf32>
      %24 = vector.broadcast %cst_8 : f32 to vector<32x128xf32>
      %25 = arith.select %22, %23, %24 : vector<32x128xi1>, vector<32x128xf32>
      %cst_9 = arith.constant 0.899999976 : f32
      %26 = vector.broadcast %cst_9 : f32 to vector<32x128xf32>
      %27 = arith.mulf %26, %18 : vector<32x128xf32>
      %cst_10 = arith.constant 1.000000e+00 : f32
      %28 = vector.broadcast %cst_10 : f32 to vector<32x128xf32>
      %29 = arith.subf %28, %27 : vector<32x128xf32>
      %cst_11 = arith.constant 9.100000e-01 : f32
      %30 = vector.broadcast %cst_11 : f32 to vector<32x128xf32>
      %31 = arith.select %22, %29, %30 : vector<32x128xi1>, vector<32x128xf32>
      %cst_12 = arith.constant 0.000000e+00 : f32
      %32 = vector.broadcast %cst_12 : f32 to vector<32x128xf32>
      %33 = arith.maximumf %16, %32 : vector<32x128xf32>
      %34 = math.absf %16 : vector<32x128xf32>
      %cst_13 = arith.constant 0.000000e+00 : f32
      %35 = vector.broadcast %cst_13 : f32 to vector<32x128xf32>
      %36 = arith.subf %35, %34 : vector<32x128xf32>
      %37 = math.exp %36 : vector<32x128xf32>
      %38 = math.log1p %37 : vector<32x128xf32>
      %39 = arith.addf %33, %38 : vector<32x128xf32>
      %40 = arith.mulf %25, %39 : vector<32x128xf32>
      %41 = arith.mulf %31, %16 : vector<32x128xf32>
      %42 = arith.subf %40, %41 : vector<32x128xf32>
      %c128_i32_14 = arith.constant 128 : i32
      %43 = arith.muli %14, %c128_i32_14 : i32
      %44 = arith.addi %11, %43 : i32
      %45 = vector.broadcast %44 : i32 to vector<32x128xi32>
      %46 = arith.addi %45, %10 : vector<32x128xi32>
      %c8_i32 = arith.constant 8 : i32
      %47 = vector.broadcast %c8_i32 : i32 to vector<32x128xi32>
      %48 = arith.cmpi slt, %46, %47 : vector<32x128xi32>
      %cst_15 = arith.constant 0.000000e+00 : f32
      %49 = vector.broadcast %cst_15 : f32 to vector<32x128xf32>
      %50 = arith.select %48, %42, %49 : vector<32x128xi1>, vector<32x128xf32>
      %51 = arith.addf %12, %50 : vector<32x128xf32>
      %c1_i32 = arith.constant 1 : i32
      %52 = vector.shape_cast %51 : vector<32x128xf32> to vector<1x32x128xf32>
      %c0_16 = arith.constant 0 : index
      %c0_17 = arith.constant 0 : index
      %c0_18 = arith.constant 0 : index
      %53 = vector.load %arg4[%c0_16, %c0_17, %c0_18] : memref<1x32x128xf32, #tpu.memory_space<vmem>>, vector<1x32x128xf32>
      tpu.vector_store %arg4[%c0_16, %c0_17, %c0_18], %52 {strides = array<i32>} : memref<1x32x128xf32, #tpu.memory_space<vmem>>, vector<1x32x128xf32>,
    } else {
    }
    return
  }
  func.func @transform_0(%arg0: i32) -> (i32, i32) {
    %c0_i32 = arith.constant 0 : i32
    %c0_i32_0 = arith.constant 0 : i32
    return %arg0, %c0_i32 : i32, i32
  }
  func.func @transform_1(%arg0: i32) -> (i32, i32) {
    %c0_i32 = arith.constant 0 : i32
    %c0_i32_0 = arith.constant 0 : i32
    return %arg0, %c0_i32 : i32, i32
  }
  func.func @transform_2(%arg0: i32) -> (i32, i32) {
    %c0_i32 = arith.constant 0 : i32
    %c0_i32_0 = arith.constant 0 : i32
    return %arg0, %c0_i32 : i32, i32
  }
  func.func @transform_3(%arg0: i32) -> (i32, i32, i32) {
    %c0_i32 = arith.constant 0 : i32
    %c0_i32_0 = arith.constant 0 : i32
    %c0_i32_1 = arith.constant 0 : i32
    return %arg0, %c0_i32, %c0_i32_0 : i32, i32, i32
  }
}

</mosaic_0001>

<llo_original>
// kernel: wsl_smoothing_loss.1
$region0: #{wsl_smoothing_loss.1}
  #allocation0 [shape = 'u32[]', space=smem, size = 0x4, offset = 0x4, fixed_abs, tag = 'smem constant byte address 0x4 - core index']
  #allocation1 [shape = 'u32[72,128]{1,0:T(1,128)}', space=vmem, size = 0x9000, scoped, tag = 'internal scratch']
  %s0 = inlined_call_operand.vmem [shape: f32[32,128], index: 0, kind: input, shape index: {}]
  %s1 = inlined_call_operand.vmem [shape: s32[32,128], index: 1, kind: input, shape index: {}]
  %s2 = inlined_call_operand.vmem [shape: f32[32,128], index: 2, kind: input, shape index: {}]
  %s3 = inlined_call_operand.vmem [shape: f32[1,32,128], index: 3, kind: output, shape index: {}]
  %s4 = sld [smem:[#allocation0]]
  $region30: #{wsl_smoothing_loss.1} parent=0
    _
  %s6 = ssub.s32 1, %s4
  %s7 = scalar_select 0, %s6, %s4
  // Predicated region
  $region2: #{wsl_smoothing_loss.1} parent=0 // pred_check
    _
  $region3: #{wsl_smoothing_loss.1} parent=0 // pred_check_branch
    %9 = sbr.rel (0) target = $region5
  $region4: #{wsl_smoothing_loss.1} parent=0 // pred_region
    _
  $region5: #{wsl_smoothing_loss.1} parent=0 // pred_fallthru
    _
  // Predicated region
  $region6: #{wsl_smoothing_loss.1} parent=0 // pred_check
    _
  $region7: #{wsl_smoothing_loss.1} parent=0 // pred_check_branch
    %11 = sbr.rel (0) target = $region9
  $region8: #{wsl_smoothing_loss.1} parent=0 // pred_region
    _
  $region9: #{wsl_smoothing_loss.1} parent=0 // pred_fallthru
    _
  // Predicated region
  $region10: #{wsl_smoothing_loss.1} parent=0 // pred_check
    _
  $region11: #{wsl_smoothing_loss.1} parent=0 // pred_check_branch
    %13 = sbr.rel (0) target = $region13
  $region12: #{wsl_smoothing_loss.1} parent=0 // pred_region
    _
  $region13: #{wsl_smoothing_loss.1} parent=0 // pred_fallthru
    _
  %p14 = scmp.ne.s32.totalorder 0, 0
  // Predicated region
  $region14: #{wsl_smoothing_loss.1} parent=0 // pred_check
    %p15 = pneg %p14
  $region15: #{wsl_smoothing_loss.1} parent=0 // pred_check_branch
    %17 = sbr.rel (%p15) target = $region17
  $region16: #{wsl_smoothing_loss.1} parent=0 // pred_region
    %v18 = vld [vmem:[%s0] sm:$0xff]
    %v19 = vld [vmem:[%s0 + $0x8] sm:$0xff]
    %v20 = vld [vmem:[%s0 + $0x10] sm:$0xff]
    %v21 = vld [vmem:[%s0 + $0x18] sm:$0xff]
    %v22 = vld [vmem:[%s2] sm:$0xff]
    %v23 = vld [vmem:[%s2 + $0x8] sm:$0xff]
    %v24 = vld [vmem:[%s2 + $0x10] sm:$0xff]
    %v25 = vld [vmem:[%s2 + $0x18] sm:$0xff]
    %v26 = vld [vmem:[%s1] sm:$0xff]
    %v27 = vld [vmem:[%s1 + $0x8] sm:$0xff]
    %v28 = vld [vmem:[%s1 + $0x10] sm:$0xff]
    %v29 = vld [vmem:[%s1 + $0x18] sm:$0xff]
    %vm30 = vcmp.eq.s32.totalorder %v26, 0
    %vm31 = vcmp.eq.s32.totalorder %v27, 0
    %vm32 = vcmp.eq.s32.totalorder %v28, 0
    %vm33 = vcmp.eq.s32.totalorder %v29, 0
    %v34 = vsel %vm30, 1.1, 0.92
    %v35 = vsel %vm31, 1.1, 0.92
    %v36 = vsel %vm32, 1.1, 0.92
    %v37 = vsel %vm33, 1.1, 0.92
    %v38 = vmul.f32 %v22, 0.9
    %v39 = vmul.f32 %v23, 0.9
    %v40 = vmul.f32 %v24, 0.9
    %v41 = vmul.f32 %v25, 0.9
    %v42 = vsub.f32 1.0, %v38
    %v43 = vsub.f32 1.0, %v39
    %v44 = vsub.f32 1.0, %v40
    %v45 = vsub.f32 1.0, %v41
    %v46 = vsel %vm30, %v42, 0.91
    %v47 = vsel %vm31, %v43, 0.91
    %v48 = vsel %vm32, %v44, 0.91
    %v49 = vsel %vm33, %v45, 0.91
    %v50 = vmax.f32 %v18, 0.0
    %v51 = vmax.f32 %v19, 0.0
    %v52 = vmax.f32 %v20, 0.0
    %v53 = vmax.f32 %v21, 0.0
    %v54 = vand.u32 2147483647, %v18
    %v55 = vand.u32 2147483647, %v19
    %v56 = vand.u32 2147483647, %v20
    %v57 = vand.u32 2147483647, %v21
    %v58 = vsub.f32 0.0, %v54
    %v59 = vsub.f32 0.0, %v55
    %v60 = vsub.f32 0.0, %v56
    %v61 = vsub.f32 0.0, %v57
    %v62 = vmul.f32 %v58, 1.442695
    %v63 = vpow.pop %v62
    %v64 = vmul.f32 %v59, 1.442695
    %v65 = vpow.pop %v64
    %v66 = vmul.f32 %v60, 1.442695
    %v67 = vpow.pop %v66
    %v68 = vmul.f32 %v61, 1.442695
    %v69 = vpow.pop %v68
    %v70 = vadd.f32 %v63, 1.0
    %v71 = vlog2.pop %v70
    %v72 = vmul.f32 %v71, 0.6931472
    %v73 = vmul.f32 -0.5, %v63
    %v74 = vadd.f32 %v73, 1.0
    %v75 = vmul.f32 %v74, %v63
    %v76 = vand.u32 2147483647, %v63
    %vm77 = vcmp.lt.f32.partialorder %v76, 0.0004427343
    %v78 = vsel %vm77, %v75, %v72
    %v79 = vadd.f32 %v65, 1.0
    %v80 = vlog2.pop %v79
    %v81 = vmul.f32 %v80, 0.6931472
    %v82 = vmul.f32 -0.5, %v65
    %v83 = vadd.f32 %v82, 1.0
    %v84 = vmul.f32 %v83, %v65
    %v85 = vand.u32 2147483647, %v65
    %vm86 = vcmp.lt.f32.partialorder %v85, 0.0004427343
    %v87 = vsel %vm86, %v84, %v81
    %v88 = vadd.f32 %v67, 1.0
    %v89 = vlog2.pop %v88
    %v90 = vmul.f32 %v89, 0.6931472
    %v91 = vmul.f32 -0.5, %v67
    %v92 = vadd.f32 %v91, 1.0
    %v93 = vmul.f32 %v92, %v67
    %v94 = vand.u32 2147483647, %v67
    %vm95 = vcmp.lt.f32.partialorder %v94, 0.0004427343
    %v96 = vsel %vm95, %v93, %v90
    %v97 = vadd.f32 %v69, 1.0
    %v98 = vlog2.pop %v97
    %v99 = vmul.f32 %v98, 0.6931472
    %v100 = vmul.f32 -0.5, %v69
    %v101 = vadd.f32 %v100, 1.0
    %v102 = vmul.f32 %v101, %v69
    %v103 = vand.u32 2147483647, %v69
    %vm104 = vcmp.lt.f32.partialorder %v103, 0.0004427343
    %v105 = vsel %vm104, %v102, %v99
    %v106 = vadd.f32 %v50, %v78
    %v107 = vadd.f32 %v51, %v87
    %v108 = vadd.f32 %v52, %v96
    %v109 = vadd.f32 %v53, %v105
    %v110 = vmul.f32 %v34, %v106
    %v111 = vmul.f32 %v35, %v107
    %v112 = vmul.f32 %v36, %v108
    %v113 = vmul.f32 %v37, %v109
    %v114 = vmul.f32 %v46, %v18
    %v115 = vmul.f32 %v47, %v19
    %v116 = vmul.f32 %v48, %v20
    %v117 = vmul.f32 %v49, %v21
    %v118 = vsub.f32 %v110, %v114
    %v119 = vsub.f32 %v111, %v115
    %v120 = vsub.f32 %v112, %v116
    %v121 = vsub.f32 %v113, %v117
    %v122 = vadd.f32 %v118, 0.0
    %v123 = vadd.f32 %v119, 0.0
    %v124 = vadd.f32 %v120, 0.0
    %v125 = vadd.f32 %v121, 0.0
    %126 = vst [vmem:[%s3] sm:$0xff] %v122
    %127 = vst [vmem:[%s3 + $0x8] sm:$0xff] %v123
    %128 = vst [vmem:[%s3 + $0x10] sm:$0xff] %v124
    %129 = vst [vmem:[%s3 + $0x18] sm:$0xff] %v125
  $region17: #{wsl_smoothing_loss.1} parent=0 // pred_fallthru
    _
  %p130 = scmp.eq.s32.totalorder 0, 0
  // Predicated region
  $region18: #{wsl_smoothing_loss.1} parent=0 // pred_check
    %p131 = pneg %p130
  $region19: #{wsl_smoothing_loss.1} parent=0 // pred_check_branch
    %133 = sbr.rel (%p131) target = $region21
  $region20: #{wsl_smoothing_loss.1} parent=0 // pred_region
    %v134 = vlaneseq
    %v135 = vshrl.u32 %v134, 7
    %v136 = vadd.s32 %v135, 8
    %v137 = vadd.s32 %v135, 16
    %v138 = vadd.s32 %v135, 24
    %v139 = vlaneseq
    %v140 = vand.u32 %v139, 127
    %v141 = vmul.u32 %v135, 128
    %v142 = vmul.u32 %v136, 128
    %v143 = vmul.u32 %v137, 128
    %v144 = vmul.u32 %v138, 128
    %v145 = vadd.s32 %v141, %v140
    %v146 = vadd.s32 %v142, %v140
    %v147 = vadd.s32 %v143, %v140
    %v148 = vadd.s32 %v144, %v140
    %s149 = smul.u32 0, 4096
    %v150 = vld [vmem:[%s0] sm:$0xff]
    %v151 = vld [vmem:[%s0 + $0x8] sm:$0xff]
    %v152 = vld [vmem:[%s0 + $0x10] sm:$0xff]
    %v153 = vld [vmem:[%s0 + $0x18] sm:$0xff]
    %v154 = vld [vmem:[%s2] sm:$0xff]
    %v155 = vld [vmem:[%s2 + $0x8] sm:$0xff]
    %v156 = vld [vmem:[%s2 + $0x10] sm:$0xff]
    %v157 = vld [vmem:[%s2 + $0x18] sm:$0xff]
    %v158 = vld [vmem:[%s1] sm:$0xff]
    %v159 = vld [vmem:[%s1 + $0x8] sm:$0xff]
    %v160 = vld [vmem:[%s1 + $0x10] sm:$0xff]
    %v161 = vld [vmem:[%s1 + $0x18] sm:$0xff]
    %vm162 = vcmp.eq.s32.totalorder %v158, 0
    %vm163 = vcmp.eq.s32.totalorder %v159, 0
    %vm164 = vcmp.eq.s32.totalorder %v160, 0
    %vm165 = vcmp.eq.s32.totalorder %v161, 0
    %v166 = vsel %vm162, 1.1, 0.92
    %v167 = vsel %vm163, 1.1, 0.92
    %v168 = vsel %vm164, 1.1, 0.92
    %v169 = vsel %vm165, 1.1, 0.92
    %v170 = vmul.f32 %v154, 0.9
    %v171 = vmul.f32 %v155, 0.9
    %v172 = vmul.f32 %v156, 0.9
    %v173 = vmul.f32 %v157, 0.9
    %v174 = vsub.f32 1.0, %v170
    %v175 = vsub.f32 1.0, %v171
    %v176 = vsub.f32 1.0, %v172
    %v177 = vsub.f32 1.0, %v173
    %v178 = vsel %vm162, %v174, 0.91
    %v179 = vsel %vm163, %v175, 0.91
    %v180 = vsel %vm164, %v176, 0.91
    %v181 = vsel %vm165, %v177, 0.91
    %v182 = vmax.f32 %v150, 0.0
    %v183 = vmax.f32 %v151, 0.0
    %v184 = vmax.f32 %v152, 0.0
    %v185 = vmax.f32 %v153, 0.0
    %v186 = vand.u32 2147483647, %v150
    %v187 = vand.u32 2147483647, %v151
    %v188 = vand.u32 2147483647, %v152
    %v189 = vand.u32 2147483647, %v153
    %v190 = vsub.f32 0.0, %v186
    %v191 = vsub.f32 0.0, %v187
    %v192 = vsub.f32 0.0, %v188
    %v193 = vsub.f32 0.0, %v189
    %v194 = vmul.f32 %v190, 1.442695
    %v195 = vpow.pop %v194
    %v196 = vmul.f32 %v191, 1.442695
    %v197 = vpow.pop %v196
    %v198 = vmul.f32 %v192, 1.442695
    %v199 = vpow.pop %v198
    %v200 = vmul.f32 %v193, 1.442695
    %v201 = vpow.pop %v200
    %v202 = vadd.f32 %v195, 1.0
    %v203 = vlog2.pop %v202
    %v204 = vmul.f32 %v203, 0.6931472
    %v205 = vmul.f32 -0.5, %v195
    %v206 = vadd.f32 %v205, 1.0
    %v207 = vmul.f32 %v206, %v195
    %v208 = vand.u32 2147483647, %v195
    %vm209 = vcmp.lt.f32.partialorder %v208, 0.0004427343
    %v210 = vsel %vm209, %v207, %v204
    %v211 = vadd.f32 %v197, 1.0
    %v212 = vlog2.pop %v211
    %v213 = vmul.f32 %v212, 0.6931472
    %v214 = vmul.f32 -0.5, %v197
    %v215 = vadd.f32 %v214, 1.0
    %v216 = vmul.f32 %v215, %v197
    %v217 = vand.u32 2147483647, %v197
    %vm218 = vcmp.lt.f32.partialorder %v217, 0.0004427343
    %v219 = vsel %vm218, %v216, %v213
    %v220 = vadd.f32 %v199, 1.0
    %v221 = vlog2.pop %v220
    %v222 = vmul.f32 %v221, 0.6931472
    %v223 = vmul.f32 -0.5, %v199
    %v224 = vadd.f32 %v223, 1.0
    %v225 = vmul.f32 %v224, %v199
    %v226 = vand.u32 2147483647, %v199
    %vm227 = vcmp.lt.f32.partialorder %v226, 0.0004427343
    %v228 = vsel %vm227, %v225, %v222
    %v229 = vadd.f32 %v201, 1.0
    %v230 = vlog2.pop %v229
    %v231 = vmul.f32 %v230, 0.6931472
    %v232 = vmul.f32 -0.5, %v201
    %v233 = vadd.f32 %v232, 1.0
    %v234 = vmul.f32 %v233, %v201
    %v235 = vand.u32 2147483647, %v201
    %vm236 = vcmp.lt.f32.partialorder %v235, 0.0004427343
    %v237 = vsel %vm236, %v234, %v231
    %v238 = vadd.f32 %v182, %v210
    %v239 = vadd.f32 %v183, %v219
    %v240 = vadd.f32 %v184, %v228
    %v241 = vadd.f32 %v185, %v237
    %v242 = vmul.f32 %v166, %v238
    %v243 = vmul.f32 %v167, %v239
    %v244 = vmul.f32 %v168, %v240
    %v245 = vmul.f32 %v169, %v241
    %v246 = vmul.f32 %v178, %v150
    %v247 = vmul.f32 %v179, %v151
    %v248 = vmul.f32 %v180, %v152
    %v249 = vmul.f32 %v181, %v153
    %v250 = vsub.f32 %v242, %v246
    %v251 = vsub.f32 %v243, %v247
    %v252 = vsub.f32 %v244, %v248
    %v253 = vsub.f32 %v245, %v249
    %s254 = smul.u32 0, 128
    %s255 = sadd.s32 %s149, %s254
    %v256 = vstv %s255
    %v257 = vadd.s32 %v256, %v145
    %v258 = vadd.s32 %v256, %v146
    %v259 = vadd.s32 %v256, %v147
    %v260 = vadd.s32 %v256, %v148
    %vm261 = vcmp.lt.s32.totalorder %v257, 8
    %vm262 = vcmp.lt.s32.totalorder %v258, 8
    %vm263 = vcmp.lt.s32.totalorder %v259, 8
    %vm264 = vcmp.lt.s32.totalorder %v260, 8
    %v265 = vsel %vm261, %v250, 0.0
    %v266 = vsel %vm262, %v251, 0.0
    %v267 = vsel %vm263, %v252, 0.0
    %v268 = vsel %vm264, %v253, 0.0
    %v269 = vadd.f32 %v265, 0.0
    %v270 = vadd.f32 %v266, 0.0
    %v271 = vadd.f32 %v267, 0.0
    %v272 = vadd.f32 %v268, 0.0
    %273 = vst [vmem:[%s3] sm:$0xff] %v269
    %274 = vst [vmem:[%s3 + $0x8] sm:$0xff] %v270
    %275 = vst [vmem:[%s3 + $0x10] sm:$0xff] %v271
    %276 = vst [vmem:[%s3 + $0x18] sm:$0xff] %v272
  $region21: #{wsl_smoothing_loss.1} parent=0 // pred_fallthru
    _
  // Predicated region
  $region22: #{wsl_smoothing_loss.1} parent=0 // pred_check
    _
  $region23: #{wsl_smoothing_loss.1} parent=0 // pred_check_branch
    %278 = sbr.rel (0) target = $region25
  $region24: #{wsl_smoothing_loss.1} parent=0 // pred_region
    _
  $region25: #{wsl_smoothing_loss.1} parent=0 // pred_fallthru
    _
  // Predicated region
  $region26: #{wsl_smoothing_loss.1} parent=0 // pred_check
    _
  $region27: #{wsl_smoothing_loss.1} parent=0 // pred_check_branch
    %280 = sbr.rel (0) target = $region29
  $region28: #{wsl_smoothing_loss.1} parent=0 // pred_region
    _
  $region29: #{wsl_smoothing_loss.1} parent=0 // pred_fallthru
    _

</llo_original>
